<compile_context>
chip_gen: v6e
topology: v6e:2x2x1
jax: 0.10.0
libtpu: 0.0.40
codegen_flags: <defaults>
</compile_context>

<pallas_src>
import functools

import jax
import jax.numpy as jnp
from jax.experimental import pallas as pl
from jax.experimental.pallas import tpu as pltpu


# VMEM sizing: scoped limit safe on every generation (v7x physical VMEM is 64 MiB);
# tile-sizing budget kept below it to leave room for weights + compiler scratch.
_VMEM_LIMIT_BYTES = 48 * 1024 * 1024
_TILE_VMEM_BUDGET = 32 * 1024 * 1024


def _encoder_layer_dims(input_dim, hidden_dim, latent_dim, depth):
    """(in, out) dims of every Linear of EncoderMLP, in forward order."""
    assert hidden_dim // 2 ** (depth - 1) >= 1
    dims = [(input_dim, hidden_dim)]
    for i in range(1, depth):
        dims.append((hidden_dim // 2 ** (i - 1), hidden_dim // 2 ** i))
    dims.append((hidden_dim // 2 ** (depth - 1), 2 * latent_dim))
    return dims


def _softplus(x):
    # Numerically stable softplus == log(1 + exp(x)) (torch.nn.Softplus, beta=1).
    return jnp.maximum(x, 0.0) + jnp.log1p(jnp.exp(-jnp.abs(x)))


def _round_up(n, m):
    return -(-n // m) * m


def _pick_tile_b(batch, per_row_bytes, vmem_budget_bytes):
    """Largest power-of-two multiple of 128 whose (double-buffered) blocks fit the
    VMEM budget and whose batch padding stays small (< ~12.5% + one vreg row).

    A single grid step is preferred whenever the whole (128-padded) batch fits:
    per-step grid overhead (~0.35 us) dominates the sub-microsecond per-step
    compute at these feature widths, so splitting just to feed both v7x
    TensorCores costs more than it saves.
    """
    b128 = _round_up(max(batch, 1), 128)
    best = 128
    for t in (128, 256, 512, 1024, 2048, 4096, 8192):
        if t * per_row_bytes > vmem_budget_bytes:
            break
        padded = _round_up(batch, t)
        if padded > max(b128, batch + batch // 8 + 127):
            break
        best = t
    return best


def _gaussian_encoder_kernel(num_hidden, latent_dim, eps, matmul_dtype, x_ref, *refs):
    """refs = (W_0, b_0, ..., W_{H-1}, b_{H-1}, W_loc, b_loc, W_logvar, b_logvar,
               loc_ref, scale_ref).

    x_ref is the torch-native (tile_b, input_dim) f32 tile. It is transposed
    in-kernel (XLU, otherwise idle here) so activations are (features, tile_b):
    batch sits on the 128-wide lane axis and every output store is lane-dense.
    Weights are torch-native (out, in) in `matmul_dtype`; biases are (out, 1) f32.
    Accumulation is always f32 via preferred_element_type. The Gaussian head
    (softplus + eps) is fused on the logvar half only.
    """
    n_params = 2 * num_hidden + 4
    loc_ref = refs[n_params]
    scale_ref = refs[n_params + 1]

    # (tile_b, input_dim) f32 -> (input_dim, tile_b) matmul dtype. Single HBM read
    # of x; no wrapper-side transpose/convert pass.
    h = jnp.transpose(x_ref[...]).astype(matmul_dtype)

    for k in range(num_hidden):
        w = refs[2 * k][...]                         # (out_k, in_k)
        b = refs[2 * k + 1][...]                     # (out_k, 1) f32
        acc = jnp.dot(w, h, preferred_element_type=jnp.float32) + b
        h = jnp.maximum(acc, 0.0).astype(matmul_dtype)   # ReLU

    w_loc = refs[2 * num_hidden][...]
    b_loc = refs[2 * num_hidden + 1][...]
    w_lv = refs[2 * num_hidden + 2][...]
    b_lv = refs[2 * num_hidden + 3][...]

    loc = jnp.dot(w_loc, h, preferred_element_type=jnp.float32) + b_loc
    logvar = jnp.dot(w_lv, h, preferred_element_type=jnp.float32) + b_lv
    # Computed in f32, so scale >= eps > 0 before the output cast. (For f32
    # outputs — the torch default — strict positivity is preserved exactly.)
    scale = _softplus(logvar) + eps

    loc_ref[...] = loc.astype(loc_ref.dtype)
    scale_ref[...] = scale.astype(scale_ref.dtype)


def gaussian_encoder_pallas(x, weights, biases, latent_dim, eps=1e-8,
                            tile_b=None, matmul_dtype=jnp.bfloat16):
    """x: [B, input_dim] f32; weights[k]: torch-native (out_k, in_k); biases[k]: (out_k,).

    Returns (loc, scale), each [B, latent_dim] — the parameters of
    MultivariateNormal(loc, scale_tril=diag(scale)).

    Precision contract: matmul operands are cast to `matmul_dtype` (default bf16,
    MXU-native) with f32 accumulation; pass matmul_dtype=jnp.float32 for
    PyTorch-faithful f32 matmuls.
    """
    B, input_dim = x.shape
    num_layers = len(weights)
    assert weights[-1].shape[0] == 2 * latent_dim
    num_hidden = num_layers - 1

    # Split the final Linear into loc / logvar halves so the kernel never slices
    # the fused (2*latent, tile_b) accumulator along the sublane axis.
    w_last, b_last = weights[-1], biases[-1]
    w_loc, w_lv = w_last[:latent_dim], w_last[latent_dim:]
    b_loc, b_lv = b_last[:latent_dim], b_last[latent_dim:]
    hidden_ws, hidden_bs = list(weights[:-1]), list(biases[:-1])

    # ---- batch tiling (lane-dense, padded to a multiple of the tile) ----------
    widths = [w.shape[0] for w in hidden_ws] + [latent_dim, latent_dim]
    per_row_bytes = (
        2 * input_dim * 4                 # double-buffered x tile (f32)
        + 2 * 2 * latent_dim * 4          # double-buffered loc/scale output tiles
        + 4 * (input_dim + sum(widths))   # live activation temporaries (upper bound)
    )
    if tile_b is None:
        tile_b = _pick_tile_b(B, per_row_bytes, _TILE_VMEM_BUDGET)
    assert tile_b % 128 == 0, "batch tile must be a multiple of 128 (lane-dense)"

    b_pad = _round_up(B, tile_b)
    x_in = x if b_pad == B else jnp.pad(x, ((0, b_pad - B), (0, 0)))
    grid = (b_pad // tile_b,)

    # ---- specs ----------------------------------------------------------------
    in_specs = [pl.BlockSpec((tile_b, input_dim), lambda i: (i, 0))]
    flat_params = []

    def _add_param(w, b):
        out_k, in_k = w.shape
        in_specs.append(pl.BlockSpec((out_k, in_k), lambda i: (0, 0)))   # resident weight
        in_specs.append(pl.BlockSpec((out_k, 1), lambda i: (0, 0)))      # resident bias
        flat_params.append(w.astype(matmul_dtype))
        flat_params.append(b.reshape(out_k, 1).astype(jnp.float32))

    for w, b in zip(hidden_ws, hidden_bs):
        _add_param(w, b)
    _add_param(w_loc, b_loc)
    _add_param(w_lv, b_lv)

    out_specs = (
        pl.BlockSpec((latent_dim, tile_b), lambda i: (0, i)),            # loc^T
        pl.BlockSpec((latent_dim, tile_b), lambda i: (0, i)),            # scale^T
    )
    out_shape = (
        jax.ShapeDtypeStruct((latent_dim, b_pad), x.dtype),
        jax.ShapeDtypeStruct((latent_dim, b_pad), x.dtype),
    )

    # Advisory cost hint for the XLA scheduler.
    matmul_flops = 2 * b_pad * sum(int(w.shape[0]) * int(w.shape[1]) for w in weights)
    bytes_accessed = (
        b_pad * input_dim * 4
        + sum(w.size * jnp.dtype(matmul_dtype).itemsize + b.size * 4
              for w, b in zip(weights, biases))
        + 2 * b_pad * latent_dim * 4
    )
    cost = pl.CostEstimate(
        flops=int(matmul_flops),
        transcendentals=int(2 * b_pad * latent_dim),   # exp + log1p in softplus
        bytes_accessed=int(bytes_accessed),
    )

    kernel = functools.partial(
        _gaussian_encoder_kernel, num_hidden, latent_dim, float(eps), matmul_dtype)

    loc_t, scale_t = pl.pallas_call(
        kernel,
        out_shape=out_shape,
        grid_spec=pltpu.PrefetchScalarGridSpec(
            num_scalar_prefetch=0,
            grid=grid,
            in_specs=in_specs,
            out_specs=out_specs,
        ),
        compiler_params=pltpu.CompilerParams(
            dimension_semantics=("parallel",),
            vmem_limit_bytes=_VMEM_LIMIT_BYTES,
        ),
        cost_estimate=cost,
    )(x_in, *flat_params)

    loc = loc_t[:, :B].T
    scale = scale_t[:, :B].T
    return loc, scale


def gaussian_encoder_ref(x, weights, biases, latent_dim, eps=1e-8,
                         matmul_dtype=jnp.float32):
    """Pure-JAX reference with matching operand precision / f32 accumulation."""
    h = x
    num_layers = len(weights)
    for k, (w, b) in enumerate(zip(weights, biases)):
        h = jnp.dot(h.astype(matmul_dtype), w.T.astype(matmul_dtype),
                    preferred_element_type=jnp.float32) + b.astype(jnp.float32)
        if k != num_layers - 1:
            h = jnp.maximum(h, 0.0)
    loc = h[:, :latent_dim]
    logvar = h[:, latent_dim:]
    scale = jax.nn.softplus(logvar) + eps
    return loc.astype(x.dtype), scale.astype(x.dtype)


def init_params(key, input_dim, hidden_dim, latent_dim, depth):
    """nn.Linear-style init; weights stored torch-native (out, in)."""
    dims = _encoder_layer_dims(input_dim, hidden_dim, latent_dim, depth)
    weights, biases = [], []
    for (d_in, d_out) in dims:
        key, kw, kb = jax.random.split(key, 3)
        scale = 1.0 / jnp.sqrt(jnp.float32(d_in))
        weights.append(jax.random.uniform(kw, (d_out, d_in), jnp.float32,
                                          minval=-scale, maxval=scale))
        biases.append(jax.random.uniform(kb, (d_out,), jnp.float32,
                                         minval=-scale, maxval=scale))
    return weights, biases


if __name__ == "__main__":
    # Module-consistent shapes (VAEConfig(input_dim=32, hidden_dim=32, latent_dim=8, depth=3)).
    input_dim, hidden_dim, latent_dim, depth = 32, 32, 8, 3

    key = jax.random.PRNGKey(0)
    key, kx = jax.random.split(key)
    weights, biases = init_params(key, input_dim, hidden_dim, latent_dim, depth)

    # ---- 1) default bf16-operand path, lane-aligned batch (single grid step) ----
    batch = 256
    x = jax.random.normal(kx, (batch, input_dim), jnp.float32)

    loc, scale = gaussian_encoder_pallas(x, weights, biases, latent_dim)
    loc, scale = jax.block_until_ready((loc, scale))

    loc_r, scale_r = gaussian_encoder_ref(x, weights, biases, latent_dim,
                                          matmul_dtype=jnp.bfloat16)
    assert loc.shape == (batch, latent_dim) and scale.shape == (batch, latent_dim)
    assert jnp.allclose(loc, loc_r, atol=2e-3, rtol=2e-3), "loc mismatch (bf16 path)"
    assert jnp.allclose(scale, scale_r, atol=2e-3, rtol=2e-3), "scale mismatch (bf16 path)"
    assert bool(jnp.all(scale > 0)), "scale must be strictly positive"

    # ---- 2) f32-operand path + ragged batch (exercises wrapper padding) ----
    batch2 = 200
    x2 = x[:batch2]
    loc2, scale2 = gaussian_encoder_pallas(x2, weights, biases, latent_dim,
                                           matmul_dtype=jnp.float32)
    loc2, scale2 = jax.block_until_ready((loc2, scale2))

    loc2_r, scale2_r = gaussian_encoder_ref(x2, weights, biases, latent_dim,
                                            matmul_dtype=jnp.float32)
    assert loc2.shape == (batch2, latent_dim) and scale2.shape == (batch2, latent_dim)
    assert jnp.allclose(loc2, loc2_r, atol=1e-4, rtol=1e-4), "loc mismatch (f32 path)"
    assert jnp.allclose(scale2, scale2_r, atol=1e-4, rtol=1e-4), "scale mismatch (f32 path)"
    assert bool(jnp.all(scale2 > 0)), "scale must be strictly positive"

    print("KERNEL_OK")
</pallas_src>

<mosaic_0001>
module attributes {stable_mosaic.version = 11 : i64} {
  func.func @_gaussian_encoder_kernel(%arg0: i32, %arg1: memref<256x32xf32, #tpu.memory_space<vmem>>, %arg2: memref<32x32xbf16, #tpu.memory_space<vmem>>, %arg3: memref<32x1xf32, #tpu.memory_space<vmem>>, %arg4: memref<16x32xbf16, #tpu.memory_space<vmem>>, %arg5: memref<16x1xf32, #tpu.memory_space<vmem>>, %arg6: memref<8x16xbf16, #tpu.memory_space<vmem>>, %arg7: memref<8x1xf32, #tpu.memory_space<vmem>>, %arg8: memref<8x8xbf16, #tpu.memory_space<vmem>>, %arg9: memref<8x1xf32, #tpu.memory_space<vmem>>, %arg10: memref<8x8xbf16, #tpu.memory_space<vmem>>, %arg11: memref<8x1xf32, #tpu.memory_space<vmem>>, %arg12: memref<8x256xf32, #tpu.memory_space<vmem>>, %arg13: memref<8x256xf32, #tpu.memory_space<vmem>>) attributes {dimension_semantics = [#tpu.dimension_semantics<parallel>], iteration_bounds = array<i64: 1>, scalar_prefetch = 0 : i64, scratch_operands = 0 : i64, tpu.core_type = #tpu.core_type<tc>, window_params = [{transform_indices = @transform_0, window_bounds = array<i64: 256, 32>}, {pipeline_mode = #tpu.pipeline_mode<synchronous>, transform_indices = @transform_1, window_bounds = array<i64: 32, 32>}, {pipeline_mode = #tpu.pipeline_mode<synchronous>, transform_indices = @transform_2, window_bounds = array<i64: 32, 1>}, {pipeline_mode = #tpu.pipeline_mode<synchronous>, transform_indices = @transform_3, window_bounds = array<i64: 16, 32>}, {pipeline_mode = #tpu.pipeline_mode<synchronous>, transform_indices = @transform_4, window_bounds = array<i64: 16, 1>}, {pipeline_mode = #tpu.pipeline_mode<synchronous>, transform_indices = @transform_5, window_bounds = array<i64: 8, 16>}, {pipeline_mode = #tpu.pipeline_mode<synchronous>, transform_indices = @transform_6, window_bounds = array<i64: 8, 1>}, {pipeline_mode = #tpu.pipeline_mode<synchronous>, transform_indices = @transform_7, window_bounds = array<i64: 8, 8>}, {pipeline_mode = #tpu.pipeline_mode<synchronous>, transform_indices = @transform_8, window_bounds = array<i64: 8, 1>}, {pipeline_mode = #tpu.pipeline_mode<synchronous>, transform_indices = @transform_9, window_bounds = array<i64: 8, 8>}, {pipeline_mode = #tpu.pipeline_mode<synchronous>, transform_indices = @transform_10, window_bounds = array<i64: 8, 1>}, {transform_indices = @transform_11, window_bounds = array<i64: 8, 256>}, {transform_indices = @transform_12, window_bounds = array<i64: 8, 256>}]} {
    %c0 = arith.constant 0 : index
    %c0_0 = arith.constant 0 : index
    %0 = vector.load %arg1[%c0, %c0_0] : memref<256x32xf32, #tpu.memory_space<vmem>>, vector<256x32xf32>
    %1 = tpu.transpose %0, [1, 0] : vector<256x32xf32> -> vector<32x256xf32>
    %2 = arith.truncf %1 : vector<32x256xf32> to vector<32x256xbf16>
    %c0_1 = arith.constant 0 : index
    %c0_2 = arith.constant 0 : index
    %3 = vector.load %arg2[%c0_1, %c0_2] : memref<32x32xbf16, #tpu.memory_space<vmem>>, vector<32x32xbf16>
    %c0_3 = arith.constant 0 : index
    %c0_4 = arith.constant 0 : index
    %4 = vector.load %arg3[%c0_3, %c0_4] : memref<32x1xf32, #tpu.memory_space<vmem>>, vector<32x1xf32>
    %cst = arith.constant dense<0.000000e+00> : vector<32x256xf32>
    %5 = tpu.matmul %3, %2, %cst {dimension_numbers = #tpu.dot_dimension_numbers<[1], [0], [0], [1], [0, 0, 1, 1], [], []>} : vector<32x32xbf16>, vector<32x256xbf16>, vector<32x256xf32> -> vector<32x256xf32>
    %6 = vector.broadcast %4 : vector<32x1xf32> to vector<32x256xf32>
    %7 = arith.addf %5, %6 : vector<32x256xf32>
    %cst_5 = arith.constant 0.000000e+00 : f32
    %8 = vector.broadcast %cst_5 : f32 to vector<32x256xf32>
    %9 = arith.maximumf %7, %8 : vector<32x256xf32>
    %10 = arith.truncf %9 : vector<32x256xf32> to vector<32x256xbf16>
    %c0_6 = arith.constant 0 : index
    %c0_7 = arith.constant 0 : index
    %11 = vector.load %arg4[%c0_6, %c0_7] : memref<16x32xbf16, #tpu.memory_space<vmem>>, vector<16x32xbf16>
    %c0_8 = arith.constant 0 : index
    %c0_9 = arith.constant 0 : index
    %12 = vector.load %arg5[%c0_8, %c0_9] : memref<16x1xf32, #tpu.memory_space<vmem>>, vector<16x1xf32>
    %cst_10 = arith.constant dense<0.000000e+00> : vector<16x256xf32>
    %13 = tpu.matmul %11, %10, %cst_10 {dimension_numbers = #tpu.dot_dimension_numbers<[1], [0], [0], [1], [0, 0, 1, 1], [], []>} : vector<16x32xbf16>, vector<32x256xbf16>, vector<16x256xf32> -> vector<16x256xf32>
    %14 = vector.broadcast %12 : vector<16x1xf32> to vector<16x256xf32>
    %15 = arith.addf %13, %14 : vector<16x256xf32>
    %cst_11 = arith.constant 0.000000e+00 : f32
    %16 = vector.broadcast %cst_11 : f32 to vector<16x256xf32>
    %17 = arith.maximumf %15, %16 : vector<16x256xf32>
    %18 = arith.truncf %17 : vector<16x256xf32> to vector<16x256xbf16>
    %c0_12 = arith.constant 0 : index
    %c0_13 = arith.constant 0 : index
    %19 = vector.load %arg6[%c0_12, %c0_13] : memref<8x16xbf16, #tpu.memory_space<vmem>>, vector<8x16xbf16>
    %c0_14 = arith.constant 0 : index
    %c0_15 = arith.constant 0 : index
    %20 = vector.load %arg7[%c0_14, %c0_15] : memref<8x1xf32, #tpu.memory_space<vmem>>, vector<8x1xf32>
    %cst_16 = arith.constant dense<0.000000e+00> : vector<8x256xf32>
    %21 = tpu.matmul %19, %18, %cst_16 {dimension_numbers = #tpu.dot_dimension_numbers<[1], [0], [0], [1], [0, 0, 1, 1], [], []>} : vector<8x16xbf16>, vector<16x256xbf16>, vector<8x256xf32> -> vector<8x256xf32>
    %22 = vector.broadcast %20 : vector<8x1xf32> to vector<8x256xf32>
    %23 = arith.addf %21, %22 : vector<8x256xf32>
    %cst_17 = arith.constant 0.000000e+00 : f32
    %24 = vector.broadcast %cst_17 : f32 to vector<8x256xf32>
    %25 = arith.maximumf %23, %24 : vector<8x256xf32>
    %26 = arith.truncf %25 : vector<8x256xf32> to vector<8x256xbf16>
    %c0_18 = arith.constant 0 : index
    %c0_19 = arith.constant 0 : index
    %27 = vector.load %arg8[%c0_18, %c0_19] : memref<8x8xbf16, #tpu.memory_space<vmem>>, vector<8x8xbf16>
    %c0_20 = arith.constant 0 : index
    %c0_21 = arith.constant 0 : index
    %28 = vector.load %arg9[%c0_20, %c0_21] : memref<8x1xf32, #tpu.memory_space<vmem>>, vector<8x1xf32>
    %c0_22 = arith.constant 0 : index
    %c0_23 = arith.constant 0 : index
    %29 = vector.load %arg10[%c0_22, %c0_23] : memref<8x8xbf16, #tpu.memory_space<vmem>>, vector<8x8xbf16>
    %c0_24 = arith.constant 0 : index
    %c0_25 = arith.constant 0 : index
    %30 = vector.load %arg11[%c0_24, %c0_25] : memref<8x1xf32, #tpu.memory_space<vmem>>, vector<8x1xf32>
    %cst_26 = arith.constant dense<0.000000e+00> : vector<8x256xf32>
    %31 = tpu.matmul %27, %26, %cst_26 {dimension_numbers = #tpu.dot_dimension_numbers<[1], [0], [0], [1], [0, 0, 1, 1], [], []>} : vector<8x8xbf16>, vector<8x256xbf16>, vector<8x256xf32> -> vector<8x256xf32>
    %32 = vector.broadcast %28 : vector<8x1xf32> to vector<8x256xf32>
    %33 = arith.addf %31, %32 : vector<8x256xf32>
    %cst_27 = arith.constant dense<0.000000e+00> : vector<8x256xf32>
    %34 = tpu.matmul %29, %26, %cst_27 {dimension_numbers = #tpu.dot_dimension_numbers<[1], [0], [0], [1], [0, 0, 1, 1], [], []>} : vector<8x8xbf16>, vector<8x256xbf16>, vector<8x256xf32> -> vector<8x256xf32>
    %35 = vector.broadcast %30 : vector<8x1xf32> to vector<8x256xf32>
    %36 = arith.addf %34, %35 : vector<8x256xf32>
    %cst_28 = arith.constant 0.000000e+00 : f32
    %37 = vector.broadcast %cst_28 : f32 to vector<8x256xf32>
    %38 = arith.maximumf %36, %37 : vector<8x256xf32>
    %39 = math.absf %36 : vector<8x256xf32>
    %cst_29 = arith.constant 0.000000e+00 : f32
    %40 = vector.broadcast %cst_29 : f32 to vector<8x256xf32>
    %41 = arith.subf %40, %39 : vector<8x256xf32>
    %42 = math.exp %41 : vector<8x256xf32>
    %43 = math.log1p %42 : vector<8x256xf32>
    %44 = arith.addf %38, %43 : vector<8x256xf32>
    %cst_30 = arith.constant 9.99999993E-9 : f32
    %45 = vector.broadcast %cst_30 : f32 to vector<8x256xf32>
    %46 = arith.addf %44, %45 : vector<8x256xf32>
    %c0_31 = arith.constant 0 : index
    %c0_32 = arith.constant 0 : index
    %47 = vector.load %arg12[%c0_31, %c0_32] : memref<8x256xf32, #tpu.memory_space<vmem>>, vector<8x256xf32>
    tpu.vector_store %arg12[%c0_31, %c0_32], %33 {strides = array<i32>} : memref<8x256xf32, #tpu.memory_space<vmem>>, vector<8x256xf32>,
    %c0_33 = arith.constant 0 : index
    %c0_34 = arith.constant 0 : index
    %48 = vector.load %arg13[%c0_33, %c0_34] : memref<8x256xf32, #tpu.memory_space<vmem>>, vector<8x256xf32>
    tpu.vector_store %arg13[%c0_33, %c0_34], %46 {strides = array<i32>} : memref<8x256xf32, #tpu.memory_space<vmem>>, vector<8x256xf32>,
    return
  }
  func.func @transform_0(%arg0: i32) -> (i32, i32) {
    %c0_i32 = arith.constant 0 : i32
    %c0_i32_0 = arith.constant 0 : i32
    return %arg0, %c0_i32 : i32, i32
  }
  func.func @transform_1(%arg0: i32) -> (i32, i32) {
    %c0_i32 = arith.constant 0 : i32
    %c0_i32_0 = arith.constant 0 : i32
    %c0_i32_1 = arith.constant 0 : i32
    return %c0_i32, %c0_i32_0 : i32, i32
  }
  func.func @transform_2(%arg0: i32) -> (i32, i32) {
    %c0_i32 = arith.constant 0 : i32
    %c0_i32_0 = arith.constant 0 : i32
    %c0_i32_1 = arith.constant 0 : i32
    return %c0_i32, %c0_i32_0 : i32, i32
  }
  func.func @transform_3(%arg0: i32) -> (i32, i32) {
    %c0_i32 = arith.constant 0 : i32
    %c0_i32_0 = arith.constant 0 : i32
    %c0_i32_1 = arith.constant 0 : i32
    return %c0_i32, %c0_i32_0 : i32, i32
  }
  func.func @transform_4(%arg0: i32) -> (i32, i32) {
    %c0_i32 = arith.constant 0 : i32
    %c0_i32_0 = arith.constant 0 : i32
    %c0_i32_1 = arith.constant 0 : i32
    return %c0_i32, %c0_i32_0 : i32, i32
  }
  func.func @transform_5(%arg0: i32) -> (i32, i32) {
    %c0_i32 = arith.constant 0 : i32
    %c0_i32_0 = arith.constant 0 : i32
    %c0_i32_1 = arith.constant 0 : i32
    return %c0_i32, %c0_i32_0 : i32, i32
  }
  func.func @transform_6(%arg0: i32) -> (i32, i32) {
    %c0_i32 = arith.constant 0 : i32
    %c0_i32_0 = arith.constant 0 : i32
    %c0_i32_1 = arith.constant 0 : i32
    return %c0_i32, %c0_i32_0 : i32, i32
  }
  func.func @transform_7(%arg0: i32) -> (i32, i32) {
    %c0_i32 = arith.constant 0 : i32
    %c0_i32_0 = arith.constant 0 : i32
    %c0_i32_1 = arith.constant 0 : i32
    return %c0_i32, %c0_i32_0 : i32, i32
  }
  func.func @transform_8(%arg0: i32) -> (i32, i32) {
    %c0_i32 = arith.constant 0 : i32
    %c0_i32_0 = arith.constant 0 : i32
    %c0_i32_1 = arith.constant 0 : i32
    return %c0_i32, %c0_i32_0 : i32, i32
  }
  func.func @transform_9(%arg0: i32) -> (i32, i32) {
    %c0_i32 = arith.constant 0 : i32
    %c0_i32_0 = arith.constant 0 : i32
    %c0_i32_1 = arith.constant 0 : i32
    return %c0_i32, %c0_i32_0 : i32, i32
  }
  func.func @transform_10(%arg0: i32) -> (i32, i32) {
    %c0_i32 = arith.constant 0 : i32
    %c0_i32_0 = arith.constant 0 : i32
    %c0_i32_1 = arith.constant 0 : i32
    return %c0_i32, %c0_i32_0 : i32, i32
  }
  func.func @transform_11(%arg0: i32) -> (i32, i32) {
    %c0_i32 = arith.constant 0 : i32
    %c0_i32_0 = arith.constant 0 : i32
    return %c0_i32, %arg0 : i32, i32
  }
  func.func @transform_12(%arg0: i32) -> (i32, i32) {
    %c0_i32 = arith.constant 0 : i32
    %c0_i32_0 = arith.constant 0 : i32
    return %c0_i32, %arg0 : i32, i32
  }
}

</mosaic_0001>

<llo_original>
// kernel: tpu_custom_call.1
$region0: #{tpu_custom_call.1}
  #allocation0 [shape = 'u32[]', space=smem, size = 0x4, offset = 0x4, fixed_abs, tag = 'smem constant byte address 0x4 - core index']
  #allocation1 [shape = 'u32[144,128]{1,0:T(1,128)}', space=vmem, size = 0x12000, scoped, tag = 'internal scratch']
  %s0 = inlined_call_operand.vmem [shape: f32[256,32], index: 0, kind: input, shape index: {}]
  %s1 = inlined_call_operand.vmem [shape: bf16[32,32], index: 1, kind: input, shape index: {}]
  %s2 = inlined_call_operand.vmem [shape: f32[32,1], index: 2, kind: input, shape index: {}]
  %s3 = inlined_call_operand.vmem [shape: bf16[16,32], index: 3, kind: input, shape index: {}]
  %s4 = inlined_call_operand.vmem [shape: f32[16,1], index: 4, kind: input, shape index: {}]
  %s5 = inlined_call_operand.vmem [shape: bf16[8,16], index: 5, kind: input, shape index: {}]
  %s6 = inlined_call_operand.vmem [shape: f32[8,1], index: 6, kind: input, shape index: {}]
  %s7 = inlined_call_operand.vmem [shape: bf16[8,8], index: 7, kind: input, shape index: {}]
  %s8 = inlined_call_operand.vmem [shape: f32[8,1], index: 8, kind: input, shape index: {}]
  %s9 = inlined_call_operand.vmem [shape: bf16[8,8], index: 9, kind: input, shape index: {}]
  %s10 = inlined_call_operand.vmem [shape: f32[8,1], index: 10, kind: input, shape index: {}]
  %s11 = inlined_call_operand.hbm [shape: f32[8,256], index: 11, kind: output, shape index: {0}]
  %s12 = inlined_call_operand.hbm [shape: f32[8,256], index: 12, kind: output, shape index: {1}]
  %13 = xla_tuple %s11, %s12
  %s14 = sld [smem:[#allocation0]]
  $region62: #{tpu_custom_call.1} parent=0
    _
  %s16 = ssub.s32 1, %s14
  %s17 = scalar_select 0, %s16, %s14
  $region1: #{tpu_custom_call.1} parent=0
    #allocation2 [shape = 'u8[8192]{0}', space=vmem, size = 0x2000, scoped, tag = 'output window, operand 0, single buffered']
    #allocation3 [shape = 's32[1]{0}', space=sflag, size = 0x4, scoped, tag = 'scoped memory for tpu_custom_call.1']
    #allocation4 [shape = 'u8[8192]{0}', space=vmem, size = 0x2000, scoped, tag = 'output window, operand 1, single buffered']
    #allocation5 [shape = 's32[1]{0}', space=sflag, size = 0x4, scoped, tag = 'scoped memory for tpu_custom_call.1']
    %18 = vsyncpa [#allocation3], 0
    %19 = vsyncpa [#allocation5], 0
    // Predicated region
    $region2: #{tpu_custom_call.1} parent=1 // pred_check
      _
    $region3: #{tpu_custom_call.1} parent=1 // pred_check_branch
      %21 = sbr.rel (0) target = $region5
    $region4: #{tpu_custom_call.1} parent=1 // pred_region
      _
    $region5: #{tpu_custom_call.1} parent=1 // pred_fallthru
      _
    // Predicated region
    $region6: #{tpu_custom_call.1} parent=1 // pred_check
      _
    $region7: #{tpu_custom_call.1} parent=1 // pred_check_branch
      %23 = sbr.rel (0) target = $region9
    $region8: #{tpu_custom_call.1} parent=1 // pred_region
      _
    $region9: #{tpu_custom_call.1} parent=1 // pred_fallthru
      _
    // Predicated region
    $region10: #{tpu_custom_call.1} parent=1 // pred_check
      _
    $region11: #{tpu_custom_call.1} parent=1 // pred_check_branch
      %25 = sbr.rel (0) target = $region13
    $region12: #{tpu_custom_call.1} parent=1 // pred_region
      _
    $region13: #{tpu_custom_call.1} parent=1 // pred_fallthru
      _
    // Predicated region
    $region14: #{tpu_custom_call.1} parent=1 // pred_check
      _
    $region15: #{tpu_custom_call.1} parent=1 // pred_check_branch
      %27 = sbr.rel (0) target = $region17
    $region16: #{tpu_custom_call.1} parent=1 // pred_region
      _
    $region17: #{tpu_custom_call.1} parent=1 // pred_fallthru
      _
    // Predicated region
    $region18: #{tpu_custom_call.1} parent=1 // pred_check
      _
    $region19: #{tpu_custom_call.1} parent=1 // pred_check_branch
      %29 = sbr.rel (0) target = $region21
    $region20: #{tpu_custom_call.1} parent=1 // pred_region
      _
    $region21: #{tpu_custom_call.1} parent=1 // pred_fallthru
      _
    // Predicated region
    $region22: #{tpu_custom_call.1} parent=1 // pred_check
      _
    $region23: #{tpu_custom_call.1} parent=1 // pred_check_branch
      %31 = sbr.rel (0) target = $region25
    $region24: #{tpu_custom_call.1} parent=1 // pred_region
      _
    $region25: #{tpu_custom_call.1} parent=1 // pred_fallthru
      _
    // Predicated region
    $region26: #{tpu_custom_call.1} parent=1 // pred_check
      _
    $region27: #{tpu_custom_call.1} parent=1 // pred_check_branch
      %33 = sbr.rel (0) target = $region29
    $region28: #{tpu_custom_call.1} parent=1 // pred_region
      _
    $region29: #{tpu_custom_call.1} parent=1 // pred_fallthru
      _
    // Predicated region
    $region30: #{tpu_custom_call.1} parent=1 // pred_check
      _
    $region31: #{tpu_custom_call.1} parent=1 // pred_check_branch
      %35 = sbr.rel (0) target = $region33
    $region32: #{tpu_custom_call.1} parent=1 // pred_region
      _
    $region33: #{tpu_custom_call.1} parent=1 // pred_fallthru
      _
    // Predicated region
    $region34: #{tpu_custom_call.1} parent=1 // pred_check
      _
    $region35: #{tpu_custom_call.1} parent=1 // pred_check_branch
      %37 = sbr.rel (0) target = $region37
    $region36: #{tpu_custom_call.1} parent=1 // pred_region
      _
    $region37: #{tpu_custom_call.1} parent=1 // pred_fallthru
      _
    // Predicated region
    $region38: #{tpu_custom_call.1} parent=1 // pred_check
      _
    $region39: #{tpu_custom_call.1} parent=1 // pred_check_branch
      %39 = sbr.rel (0) target = $region41
    $region40: #{tpu_custom_call.1} parent=1 // pred_region
      _
    $region41: #{tpu_custom_call.1} parent=1 // pred_fallthru
      _
    // Predicated region
    $region42: #{tpu_custom_call.1} parent=1 // pred_check
      _
    $region43: #{tpu_custom_call.1} parent=1 // pred_check_branch
      %41 = sbr.rel (0) target = $region45
    $region44: #{tpu_custom_call.1} parent=1 // pred_region
      _
    $region45: #{tpu_custom_call.1} parent=1 // pred_fallthru
      _
    %v43 = vld [vmem:[%s0] sm:$0xff]
    %v44 = vld [vmem:[%s0 + $0x8] sm:$0xff]
    %v45 = vld [vmem:[%s0 + $0x10] sm:$0xff]
    %v46 = vld [vmem:[%s0 + $0x18] sm:$0xff]
    %v47 = vld [vmem:[%s0 + $0x20] sm:$0xff]
    %v48 = vld [vmem:[%s0 + $0x28] sm:$0xff]
    %v49 = vld [vmem:[%s0 + $0x30] sm:$0xff]
    %v50 = vld [vmem:[%s0 + $0x38] sm:$0xff]
    %v51 = vld [vmem:[%s0 + $0x40] sm:$0xff]
    %v52 = vld [vmem:[%s0 + $0x48] sm:$0xff]
    %v53 = vld [vmem:[%s0 + $0x50] sm:$0xff]
    %v54 = vld [vmem:[%s0 + $0x58] sm:$0xff]
    %v55 = vld [vmem:[%s0 + $0x60] sm:$0xff]
    %v56 = vld [vmem:[%s0 + $0x68] sm:$0xff]
    %v57 = vld [vmem:[%s0 + $0x70] sm:$0xff]
    %v58 = vld [vmem:[%s0 + $0x78] sm:$0xff]
    %v59 = vld [vmem:[%s0 + $0x80] sm:$0xff]
    %v60 = vld [vmem:[%s0 + $0x88] sm:$0xff]
    %v61 = vld [vmem:[%s0 + $0x90] sm:$0xff]
    %v62 = vld [vmem:[%s0 + $0x98] sm:$0xff]
    %v63 = vld [vmem:[%s0 + $0xa0] sm:$0xff]
    %v64 = vld [vmem:[%s0 + $0xa8] sm:$0xff]
    %v65 = vld [vmem:[%s0 + $0xb0] sm:$0xff]
    %v66 = vld [vmem:[%s0 + $0xb8] sm:$0xff]
    %v67 = vld [vmem:[%s0 + $0xc0] sm:$0xff]
    %v68 = vld [vmem:[%s0 + $0xc8] sm:$0xff]
    %v69 = vld [vmem:[%s0 + $0xd0] sm:$0xff]
    %v70 = vld [vmem:[%s0 + $0xd8] sm:$0xff]
    %v71 = vld [vmem:[%s0 + $0xe0] sm:$0xff]
    %v72 = vld [vmem:[%s0 + $0xe8] sm:$0xff]
    %v73 = vld [vmem:[%s0 + $0xf0] sm:$0xff]
    %v74 = vld [vmem:[%s0 + $0xf8] sm:$0xff]
    %75 = vxpose.xlu0.b32.start [1/16] %v43, 128
    %76 = vxpose.xlu0.b32.cont [2/16] %v44, 128
    %77 = vxpose.xlu0.b32.cont [3/16] %v45, 128
    %78 = vxpose.xlu0.b32.cont [4/16] %v46, 128
    %79 = vxpose.xlu0.b32.cont [5/16] %v47, 128
    %80 = vxpose.xlu0.b32.cont [6/16] %v48, 128
    %81 = vxpose.xlu0.b32.cont [7/16] %v49, 128
    %82 = vxpose.xlu0.b32.cont [8/16] %v50, 128
    %83 = vxpose.xlu0.b32.cont [9/16] %v51, 128
    %84 = vxpose.xlu0.b32.cont [10/16] %v52, 128
    %85 = vxpose.xlu0.b32.cont [11/16] %v53, 128
    %86 = vxpose.xlu0.b32.cont [12/16] %v54, 128
    %87 = vxpose.xlu0.b32.cont [13/16] %v55, 128
    %88 = vxpose.xlu0.b32.cont [14/16] %v56, 128
    %89 = vxpose.xlu0.b32.cont [15/16] %v57, 128
    %90 = vxpose.xlu0.b32.end [16/16] %v58, 128
    %v91 = vpop.trf.xlu0
    %v92 = vpop.trf.xlu0
    %v93 = vpop.trf.xlu0
    %v94 = vpop.trf.xlu0
    %v95 = vpop.trf.xlu0
    %v96 = vpop.trf.xlu0
    %v97 = vpop.trf.xlu0
    %v98 = vpop.trf.xlu0
    %v99 = vpop.trf.xlu0
    %v100 = vpop.trf.xlu0
    %v101 = vpop.trf.xlu0
    %v102 = vpop.trf.xlu0
    %v103 = vpop.trf.xlu0
    %v104 = vpop.trf.xlu0
    %v105 = vpop.trf.xlu0
    %v106 = vpop.trf.xlu0
    %107 = vxpose.xlu0.b32.start [1/16] %v59, 128
    %108 = vxpose.xlu0.b32.cont [2/16] %v60, 128
    %109 = vxpose.xlu0.b32.cont [3/16] %v61, 128
    %110 = vxpose.xlu0.b32.cont [4/16] %v62, 128
    %111 = vxpose.xlu0.b32.cont [5/16] %v63, 128
    %112 = vxpose.xlu0.b32.cont [6/16] %v64, 128
    %113 = vxpose.xlu0.b32.cont [7/16] %v65, 128
    %114 = vxpose.xlu0.b32.cont [8/16] %v66, 128
    %115 = vxpose.xlu0.b32.cont [9/16] %v67, 128
    %116 = vxpose.xlu0.b32.cont [10/16] %v68, 128
    %117 = vxpose.xlu0.b32.cont [11/16] %v69, 128
    %118 = vxpose.xlu0.b32.cont [12/16] %v70, 128
    %119 = vxpose.xlu0.b32.cont [13/16] %v71, 128
    %120 = vxpose.xlu0.b32.cont [14/16] %v72, 128
    %121 = vxpose.xlu0.b32.cont [15/16] %v73, 128
    %122 = vxpose.xlu0.b32.end [16/16] %v74, 128
    %v123 = vpop.trf.xlu0
    %v124 = vpop.trf.xlu0
    %v125 = vpop.trf.xlu0
    %v126 = vpop.trf.xlu0
    %v127 = vpop.trf.xlu0
    %v128 = vpop.trf.xlu0
    %v129 = vpop.trf.xlu0
    %v130 = vpop.trf.xlu0
    %v131 = vpop.trf.xlu0
    %v132 = vpop.trf.xlu0
    %v133 = vpop.trf.xlu0
    %v134 = vpop.trf.xlu0
    %v135 = vpop.trf.xlu0
    %v136 = vpop.trf.xlu0
    %v137 = vpop.trf.xlu0
    %v138 = vpop.trf.xlu0
    %v139 = vpack.c.bf16 %v92, %v91
    %v140 = vpack.c.bf16 %v124, %v123
    %v141 = vpack.c.bf16 %v94, %v93
    %v142 = vpack.c.bf16 %v126, %v125
    %v143 = vld [vmem:[%s1] sm:$0xf]
    %v144 = vld [vmem:[%s1 + $0x4] sm:$0xf]
    %v145 = vld [vmem:[%s1 + $0x8] sm:$0xf]
    %v146 = vld [vmem:[%s1 + $0xc] sm:$0xf]
    %v147 = vld [vmem:[%s2] sm:$0xff]
    %v148 = vld [vmem:[%s2 + $0x8] sm:$0xff]
    %v149 = vld [vmem:[%s2 + $0x10] sm:$0xff]
    %v150 = vld [vmem:[%s2 + $0x18] sm:$0xff]
    %152 = vset.pattern.permute.xlu0 0
    %153 = vperm.xlu0 %152, %v147
    %v154 = vpop.permute.xlu0 %153
    %157 = vset.pattern.permute.xlu0 0
    %158 = vperm.xlu0 %157, %v148
    %v159 = vpop.permute.xlu0 %158
    %162 = vset.pattern.permute.xlu0 0
    %163 = vperm.xlu0 %162, %v149
    %v164 = vpop.permute.xlu0 %163
    %167 = vset.pattern.permute.xlu0 0
    %168 = vperm.xlu0 %167, %v150
    %v169 = vpop.permute.xlu0 %168
    %v175 = vunpack.c.l.b16 %v143
    %v176 = vunpack.c.l.b16 %v144
    %v177 = vunpack.c.l.b16 %v145
    %v178 = vunpack.c.l.b16 %v146
    %v179 = vpack.c.b16 %v176, %v175
    %v180 = vpack.c.b16 %v178, %v177
    %vm181 = vcmask 261120
    %v183 = vsel %vm181, %v179, 0
    %v186 = vsel %vm181, %v180, 0
    %188 = vmatprep.subr.bf16.mxu0 0
    %189 = vmatpush1.bf16.msra.mxu0 0
    %190 = vmatprep.subr.bf16.mxu0 0
    %191 = vmatpush1.bf16.msra.mxu0 0
    %192 = vmatprep.subr.bf16.mxu0 0
    %193 = vmatpush1.bf16.msra.mxu0 0
    %194 = vmatprep.subr.bf16.mxu0 0
    %195 = vmatpush1.bf16.msra.mxu0 0
    %196 = vmatprep.subr.bf16.mxu0 0
    %197 = vmatpush1.bf16.msra.mxu0 0
    %198 = vmatprep.subr.bf16.mxu0 0
    %199 = vmatpush1.bf16.msra.mxu0 0
    %200 = vmatprep.subr.bf16.mxu0 %v142
    %201 = vmatpush1.bf16.msra.mxu0 %v141
    %202 = vmatprep.subr.bf16.mxu0 %v140
    %203 = vmatpush1.bf16.msra.mxu0 %v139
    %204 = vmatprep.subr.bf16.mxu0 0
    %205 = vmatpush2.bf16.msra.mxu0 0
    %206 = vmatprep.subr.bf16.mxu0 0
    %207 = vmatpush2.bf16.msra.mxu0 0
    %208 = vmatprep.subr.bf16.mxu0 0
    %209 = vmatpush2.bf16.msra.mxu0 0
    %210 = vmatprep.subr.bf16.mxu0 0
    %211 = vmatpush2.bf16.msra.mxu0 0
    %212 = vmatprep.subr.bf16.mxu0 0
    %213 = vmatpush2.bf16.msra.mxu0 0
    %214 = vmatprep.subr.bf16.mxu0 0
    %215 = vmatpush2.bf16.msra.mxu0 0
    %216 = vmatprep.subr.bf16.mxu0 0
    %217 = vmatpush2.bf16.msra.mxu0 0
    %218 = vmatprep.subr.bf16.mxu0 0
    %219 = vmatpush2.bf16.msra.mxu0 0
    %220 = vmatprep.mubr.bf16.mxu0 0
    %221 = vmatmul.mubr.bf16.gmra.mxu0 %v183
    %v222 = vpop.f32.mrf.mxu0
    %v223 = vadd.f32 %v154, %v222
    %v224 = vpop.f32.mrf.mxu0
    %v225 = vadd.f32 %v154, %v224
    %v226 = vpop.f32.mrf.mxu0
    %v227 = vadd.f32 %v159, %v226
    %v228 = vpop.f32.mrf.mxu0
    %v229 = vadd.f32 %v159, %v228
    %230 = vmatprep.mubr.bf16.mxu0 0
    %231 = vmatmul.mubr.bf16.gmra.mxu0 %v186
    %v232 = vpop.f32.mrf.mxu0
    %v233 = vadd.f32 %v164, %v232
    %v234 = vpop.f32.mrf.mxu0
    %v235 = vadd.f32 %v164, %v234
    %v236 = vpop.f32.mrf.mxu0
    %v237 = vadd.f32 %v169, %v236
    %v238 = vpop.f32.mrf.mxu0
    %v239 = vadd.f32 %v169, %v238
    %240 = vdwg.mxu0
    %v241 = vmax.f32 %v223, 0.0
    %v242 = vmax.f32 %v225, 0.0
    %v243 = vmax.f32 %v227, 0.0
    %v244 = vmax.f32 %v229, 0.0
    %v245 = vmax.f32 %v233, 0.0
    %v246 = vmax.f32 %v235, 0.0
    %v247 = vmax.f32 %v237, 0.0
    %v248 = vmax.f32 %v239, 0.0
    %v249 = vpack.c.bf16 %v243, %v241
    %v250 = vpack.c.bf16 %v244, %v242
    %v251 = vpack.c.bf16 %v247, %v245
    %v252 = vpack.c.bf16 %v248, %v246
    %v253 = vld [vmem:[%s3] sm:$0xf]
    %v254 = vld [vmem:[%s3 + $0x4] sm:$0xf]
    %v255 = vld [vmem:[%s4] sm:$0xff]
    %v256 = vld [vmem:[%s4 + $0x8] sm:$0xff]
    %258 = vset.pattern.permute.xlu0 0
    %259 = vperm.xlu0 %258, %v255
    %v260 = vpop.permute.xlu0 %259
    %263 = vset.pattern.permute.xlu0 0
    %264 = vperm.xlu0 %263, %v256
    %v265 = vpop.permute.xlu0 %264
    %v269 = vunpack.c.l.b16 %v253
    %v270 = vunpack.c.l.b16 %v254
    %v271 = vpack.c.b16 %v270, %v269
    %v273 = vsel %vm181, %v271, 0
    %275 = vmatprep.subr.bf16.mxu0 0
    %276 = vmatpush1.bf16.msra.mxu0 0
    %277 = vmatprep.subr.bf16.mxu0 0
    %278 = vmatpush1.bf16.msra.mxu0 0
    %279 = vmatprep.subr.bf16.mxu0 0
    %280 = vmatpush1.bf16.msra.mxu0 0
    %281 = vmatprep.subr.bf16.mxu0 0
    %282 = vmatpush1.bf16.msra.mxu0 0
    %283 = vmatprep.subr.bf16.mxu0 0
    %284 = vmatpush1.bf16.msra.mxu0 0
    %285 = vmatprep.subr.bf16.mxu0 0
    %286 = vmatpush1.bf16.msra.mxu0 0
    %287 = vmatprep.subr.bf16.mxu0 %v252
    %288 = vmatpush1.bf16.msra.mxu0 %v251
    %289 = vmatprep.subr.bf16.mxu0 %v250
    %290 = vmatpush1.bf16.msra.mxu0 %v249
    %291 = vmatprep.subr.bf16.mxu0 0
    %292 = vmatpush2.bf16.msra.mxu0 0
    %293 = vmatprep.subr.bf16.mxu0 0
    %294 = vmatpush2.bf16.msra.mxu0 0
    %295 = vmatprep.subr.bf16.mxu0 0
    %296 = vmatpush2.bf16.msra.mxu0 0
    %297 = vmatprep.subr.bf16.mxu0 0
    %298 = vmatpush2.bf16.msra.mxu0 0
    %299 = vmatprep.subr.bf16.mxu0 0
    %300 = vmatpush2.bf16.msra.mxu0 0
    %301 = vmatprep.subr.bf16.mxu0 0
    %302 = vmatpush2.bf16.msra.mxu0 0
    %303 = vmatprep.subr.bf16.mxu0 0
    %304 = vmatpush2.bf16.msra.mxu0 0
    %305 = vmatprep.subr.bf16.mxu0 0
    %306 = vmatpush2.bf16.msra.mxu0 0
    %307 = vmatprep.mubr.bf16.mxu0 0
    %308 = vmatmul.mubr.bf16.gmra.mxu0 %v273
    %v309 = vpop.f32.mrf.mxu0
    %v310 = vadd.f32 %v260, %v309
    %v311 = vpop.f32.mrf.mxu0
    %v312 = vadd.f32 %v260, %v311
    %v313 = vpop.f32.mrf.mxu0
    %v314 = vadd.f32 %v265, %v313
    %v315 = vpop.f32.mrf.mxu0
    %v316 = vadd.f32 %v265, %v315
    %317 = vdwg.mxu0
    %v318 = vmax.f32 %v310, 0.0
    %v319 = vmax.f32 %v312, 0.0
    %v320 = vmax.f32 %v314, 0.0
    %v321 = vmax.f32 %v316, 0.0
    %v322 = vpack.c.bf16 %v320, %v318
    %v323 = vpack.c.bf16 %v321, %v319
    %v324 = vld [vmem:[%s5] sm:$0xf]
    %v325 = vld [vmem:[%s6] sm:$0xff]
    %327 = vset.pattern.permute.xlu0 0
    %328 = vperm.xlu0 %327, %v325
    %v329 = vpop.permute.xlu0 %328
    %vm331 = vcmask 130048
    %v333 = vsel %vm331, %v324, 0
    %335 = vmatprep.subr.bf16.mxu0 0
    %336 = vmatpush1.bf16.msra.mxu0 0
    %337 = vmatprep.subr.bf16.mxu0 0
    %338 = vmatpush1.bf16.msra.mxu0 0
    %339 = vmatprep.subr.bf16.mxu0 0
    %340 = vmatpush1.bf16.msra.mxu0 0
    %341 = vmatprep.subr.bf16.mxu0 0
    %342 = vmatpush1.bf16.msra.mxu0 0
    %343 = vmatprep.subr.bf16.mxu0 0
    %344 = vmatpush1.bf16.msra.mxu0 0
    %345 = vmatprep.subr.bf16.mxu0 0
    %346 = vmatpush1.bf16.msra.mxu0 0
    %347 = vmatprep.subr.bf16.mxu0 0
    %348 = vmatpush1.bf16.msra.mxu0 0
    %349 = vmatprep.subr.bf16.mxu0 %v323
    %350 = vmatpush1.bf16.msra.mxu0 %v322
    %351 = vmatprep.subr.bf16.mxu0 0
    %352 = vmatpush2.bf16.msra.mxu0 0
    %353 = vmatprep.subr.bf16.mxu0 0
    %354 = vmatpush2.bf16.msra.mxu0 0
    %355 = vmatprep.subr.bf16.mxu0 0
    %356 = vmatpush2.bf16.msra.mxu0 0
    %357 = vmatprep.subr.bf16.mxu0 0
    %358 = vmatpush2.bf16.msra.mxu0 0
    %359 = vmatprep.subr.bf16.mxu0 0
    %360 = vmatpush2.bf16.msra.mxu0 0
    %361 = vmatprep.subr.bf16.mxu0 0
    %362 = vmatpush2.bf16.msra.mxu0 0
    %363 = vmatprep.subr.bf16.mxu0 0
    %364 = vmatpush2.bf16.msra.mxu0 0
    %365 = vmatprep.subr.bf16.mxu0 0
    %366 = vmatpush2.bf16.msra.mxu0 0
    %367 = vmatprep.mubr.bf16.mxu0 0
    %368 = vmatmul.mubr.bf16.gmra.mxu0 %v333
    %v369 = vpop.f32.mrf.mxu0
    %v370 = vadd.f32 %v329, %v369
    %v371 = vpop.f32.mrf.mxu0
    %v372 = vadd.f32 %v329, %v371
    %v373 = vpop.f32.mrf.mxu0
    %v374 = vpop.f32.mrf.mxu0
    %375 = vdwg.mxu0
    %v376 = vmax.f32 %v370, 0.0
    %v377 = vmax.f32 %v372, 0.0
    %v378 = vpack.c.bf16 %v376, %v376
    %v379 = vpack.c.bf16 %v377, %v377
    %v380 = vld [vmem:[%s7] sm:$0xf]
    %v381 = vld [vmem:[%s8] sm:$0xff]
    %v382 = vld [vmem:[%s9] sm:$0xf]
    %v383 = vld [vmem:[%s10] sm:$0xff]
    %385 = vset.pattern.permute.xlu0 0
    %386 = vperm.xlu0 %385, %v381
    %v387 = vpop.permute.xlu0 %386
    %vm389 = vcmask 64512
    %v391 = vsel %vm389, %v380, 0
    %vm393 = vcmask 1043456
    %v395 = vsel %vm393, %v378, 0
    %v398 = vsel %vm393, %v379, 0
    %400 = vmatprep.subr.bf16.mxu0 0
    %401 = vmatpush1.bf16.msra.mxu0 0
    %402 = vmatprep.subr.bf16.mxu0 0
    %403 = vmatpush1.bf16.msra.mxu0 0
    %404 = vmatprep.subr.bf16.mxu0 0
    %405 = vmatpush1.bf16.msra.mxu0 0
    %406 = vmatprep.subr.bf16.mxu0 0
    %407 = vmatpush1.bf16.msra.mxu0 0
    %408 = vmatprep.subr.bf16.mxu0 0
    %409 = vmatpush1.bf16.msra.mxu0 0
    %410 = vmatprep.subr.bf16.mxu0 0
    %411 = vmatpush1.bf16.msra.mxu0 0
    %412 = vmatprep.subr.bf16.mxu0 0
    %413 = vmatpush1.bf16.msra.mxu0 0
    %414 = vmatprep.subr.bf16.mxu0 %v398
    %415 = vmatpush1.bf16.msra.mxu0 %v395
    %416 = vmatprep.subr.bf16.mxu0 0
    %417 = vmatpush2.bf16.msra.mxu0 0
    %418 = vmatprep.subr.bf16.mxu0 0
    %419 = vmatpush2.bf16.msra.mxu0 0
    %420 = vmatprep.subr.bf16.mxu0 0
    %421 = vmatpush2.bf16.msra.mxu0 0
    %422 = vmatprep.subr.bf16.mxu0 0
    %423 = vmatpush2.bf16.msra.mxu0 0
    %424 = vmatprep.subr.bf16.mxu0 0
    %425 = vmatpush2.bf16.msra.mxu0 0
    %426 = vmatprep.subr.bf16.mxu0 0
    %427 = vmatpush2.bf16.msra.mxu0 0
    %428 = vmatprep.subr.bf16.mxu0 0
    %429 = vmatpush2.bf16.msra.mxu0 0
    %430 = vmatprep.subr.bf16.mxu0 0
    %431 = vmatpush2.bf16.msra.mxu0 0
    %432 = vmatprep.mubr.bf16.mxu0 0
    %433 = vmatmul.mubr.bf16.gmra.mxu0 %v391
    %v434 = vpop.f32.mrf.mxu0
    %v435 = vadd.f32 %v387, %v434
    %v436 = vpop.f32.mrf.mxu0
    %v437 = vadd.f32 %v387, %v436
    %v438 = vpop.f32.mrf.mxu0
    %v439 = vpop.f32.mrf.mxu0
    %440 = vdwg.mxu0
    %442 = vset.pattern.permute.xlu0 0
    %443 = vperm.xlu0 %442, %v383
    %v444 = vpop.permute.xlu0 %443
    %v447 = vsel %vm389, %v382, 0
    %449 = vmatprep.subr.bf16.mxu0 0
    %450 = vmatpush1.bf16.msra.mxu0 0
    %451 = vmatprep.subr.bf16.mxu0 0
    %452 = vmatpush1.bf16.msra.mxu0 0
    %453 = vmatprep.subr.bf16.mxu0 0
    %454 = vmatpush1.bf16.msra.mxu0 0
    %455 = vmatprep.subr.bf16.mxu0 0
    %456 = vmatpush1.bf16.msra.mxu0 0
    %457 = vmatprep.subr.bf16.mxu0 0
    %458 = vmatpush1.bf16.msra.mxu0 0
    %459 = vmatprep.subr.bf16.mxu0 0
    %460 = vmatpush1.bf16.msra.mxu0 0
    %461 = vmatprep.subr.bf16.mxu0 0
    %462 = vmatpush1.bf16.msra.mxu0 0
    %463 = vmatprep.subr.bf16.mxu0 %v398
    %464 = vmatpush1.bf16.msra.mxu0 %v395
    %465 = vmatprep.subr.bf16.mxu0 0
    %466 = vmatpush2.bf16.msra.mxu0 0
    %467 = vmatprep.subr.bf16.mxu0 0
    %468 = vmatpush2.bf16.msra.mxu0 0
    %469 = vmatprep.subr.bf16.mxu0 0
    %470 = vmatpush2.bf16.msra.mxu0 0
    %471 = vmatprep.subr.bf16.mxu0 0
    %472 = vmatpush2.bf16.msra.mxu0 0
    %473 = vmatprep.subr.bf16.mxu0 0
    %474 = vmatpush2.bf16.msra.mxu0 0
    %475 = vmatprep.subr.bf16.mxu0 0
    %476 = vmatpush2.bf16.msra.mxu0 0
    %477 = vmatprep.subr.bf16.mxu0 0
    %478 = vmatpush2.bf16.msra.mxu0 0
    %479 = vmatprep.subr.bf16.mxu0 0
    %480 = vmatpush2.bf16.msra.mxu0 0
    %481 = vmatprep.mubr.bf16.mxu0 0
    %482 = vmatmul.mubr.bf16.gmra.mxu0 %v447
    %v483 = vpop.f32.mrf.mxu0
    %v484 = vadd.f32 %v444, %v483
    %v485 = vpop.f32.mrf.mxu0
    %v486 = vadd.f32 %v444, %v485
    %v487 = vpop.f32.mrf.mxu0
    %v488 = vpop.f32.mrf.mxu0
    %489 = vdwg.mxu0
    %v490 = vmax.f32 %v484, 0.0
    %v491 = vmax.f32 %v486, 0.0
    %v492 = vand.u32 2147483647, %v484
    %v493 = vand.u32 2147483647, %v486
    %v494 = vsub.f32 0.0, %v492
    %v495 = vsub.f32 0.0, %v493
    %v496 = vmul.f32 %v494, 1.442695
    %v497 = vpow.pop %v496
    %v498 = vmul.f32 %v495, 1.442695
    %v499 = vpow.pop %v498
    %v500 = vadd.f32 %v497, 1.0
    %v501 = vlog2.pop %v500
    %v502 = vmul.f32 %v501, 0.6931472
    %v503 = vmul.f32 -0.5, %v497
    %v504 = vadd.f32 %v503, 1.0
    %v505 = vmul.f32 %v504, %v497
    %v506 = vand.u32 2147483647, %v497
    %vm507 = vcmp.lt.f32.partialorder %v506, 0.0004427343
    %v508 = vsel %vm507, %v505, %v502
    %v509 = vadd.f32 %v499, 1.0
    %v510 = vlog2.pop %v509
    %v511 = vmul.f32 %v510, 0.6931472
    %v512 = vmul.f32 -0.5, %v499
    %v513 = vadd.f32 %v512, 1.0
    %v514 = vmul.f32 %v513, %v499
    %v515 = vand.u32 2147483647, %v499
    %vm516 = vcmp.lt.f32.partialorder %v515, 0.0004427343
    %v517 = vsel %vm516, %v514, %v511
    %v518 = vadd.f32 %v490, %v508
    %v519 = vadd.f32 %v491, %v517
    %v520 = vadd.f32 %v518, 1e-08
    %v521 = vadd.f32 %v519, 1e-08
    %522 = vst [vmem:[#allocation2] sm:$0xff] %v435
    %523 = vst [vmem:[#allocation2 + $0x8] sm:$0xff] %v437
    %524 = vst [vmem:[#allocation4] sm:$0xff] %v520
    %525 = vst [vmem:[#allocation4 + $0x8] sm:$0xff] %v521
    // Predicated region
    $region46: #{tpu_custom_call.1} parent=1 // pred_check
      _
    $region47: #{tpu_custom_call.1} parent=1 // pred_check_branch
      %527 = sbr.rel (0) target = $region49
    $region48: #{tpu_custom_call.1} parent=1 // pred_region
      %s529 = ssub.s32 256, 256
      %530 = vsyncadd [#allocation3], %s529
      %s532 = sshll.u32 [#allocation2], 4
      %s533 = int_to_ptr.vmem [resolvable:$true] %s532
      %535 = dma.vmem_to_hbm [thread:$0]  %s533, 256, %s11, [#allocation3]
    $region49: #{tpu_custom_call.1} parent=1 // pred_fallthru
      _
    // Predicated region
    $region50: #{tpu_custom_call.1} parent=1 // pred_check
      _
    $region51: #{tpu_custom_call.1} parent=1 // pred_check_branch
      %537 = sbr.rel (0) target = $region53
    $region52: #{tpu_custom_call.1} parent=1 // pred_region
      %s539 = ssub.s32 256, 256
      %540 = vsyncadd [#allocation5], %s539
      %s542 = sshll.u32 [#allocation4], 4
      %s543 = int_to_ptr.vmem [resolvable:$true] %s542
      %545 = dma.vmem_to_hbm [thread:$0]  %s543, 256, %s12, [#allocation5]
    $region53: #{tpu_custom_call.1} parent=1 // pred_fallthru
      _
    // Predicated region
    $region54: #{tpu_custom_call.1} parent=1 // pred_check
      _
    $region55: #{tpu_custom_call.1} parent=1 // pred_check_branch
      %547 = sbr.rel (0) target = $region57
    $region56: #{tpu_custom_call.1} parent=1 // pred_region
      %548 = dma.done [#allocation3], 256
    $region57: #{tpu_custom_call.1} parent=1 // pred_fallthru
      _
    // Predicated region
    $region58: #{tpu_custom_call.1} parent=1 // pred_check
      _
    $region59: #{tpu_custom_call.1} parent=1 // pred_check_branch
      %550 = sbr.rel (0) target = $region61
    $region60: #{tpu_custom_call.1} parent=1 // pred_region
      %551 = dma.done [#allocation5], 256
    $region61: #{tpu_custom_call.1} parent=1 // pred_fallthru
      _
    %552 = vsyncpa [#allocation3], 1
    %553 = vsyncpa [#allocation5], 1

</llo_original>
